<compile_context>
chip_gen: v7x
topology: tpu7x:2x2x1
jax: 0.10.0
libtpu: 0.0.40
codegen_flags: <defaults>
</compile_context>

<pallas_src>
import math
import numpy as np
import jax
import jax.numpy as jnp
from jax.experimental import pallas as pl
from jax.experimental.pallas import tpu as pltpu


_LANE = 128
_SUB = 8
_VMEM_BUDGET = 40 * 1024 * 1024   # conservative: fits v7x's 64 MiB/TC physical VMEM


# ---------------------------------------------------------------------------
# Deterministic Watts-Strogatz sparse mask (numpy re-implementation of the
# nx.watts_strogatz_graph based generator in the reference module).
# Host-side setup only; not part of the kernel.
# ---------------------------------------------------------------------------
def generate_watts_strogatz_sparse_mask(in_features, out_features, k=4, p=0.5, seed=0):
    n = in_features
    rng = np.random.RandomState(seed)
    adj = np.zeros((n, n), dtype=bool)
    # ring lattice: each node connected to k nearest neighbors (k/2 per side)
    for j in range(1, k // 2 + 1):
        for i in range(n):
            v = (i + j) % n
            adj[i, v] = adj[v, i] = True
    # rewiring with probability p
    for j in range(1, k // 2 + 1):
        for i in range(n):
            if rng.rand() < p:
                u, v = i, (i + j) % n
                candidates = [w for w in range(n) if w != u and not adj[u, w]]
                if candidates:
                    w = candidates[rng.randint(len(candidates))]
                    adj[u, v] = adj[v, u] = False
                    adj[u, w] = adj[w, u] = True
    mask = np.zeros((in_features, out_features), dtype=np.float32)
    for i in range(n):
        for nb in np.nonzero(adj[i])[0]:
            if nb < out_features:
                mask[i, nb] = 1.0
    return jnp.asarray(mask)


# ---------------------------------------------------------------------------
# Helpers
# ---------------------------------------------------------------------------
def _round_up(v, m):
    return ((v + m - 1) // m) * m


def _cdiv(a, b):
    return (a + b - 1) // b


def _choose_m_tiling(M, max_tile_m):
    """Balanced M tiling: pad only to a multiple of 8, split into near-equal
    tiles (minimal tail waste), and produce >=2 tiles when there is enough
    work so v7x's two TensorCores both get M-tiles."""
    mp8 = _round_up(max(M, _SUB), _SUB)
    n_tiles = _cdiv(mp8, max_tile_m)
    if mp8 >= 2 * _SUB:
        n_tiles = max(n_tiles, 2)
    tm = _round_up(_cdiv(mp8, n_tiles), _SUB)
    n_tiles = _cdiv(mp8, tm)
    return tm, n_tiles, tm * n_tiles


# ---------------------------------------------------------------------------
# One-time weight preparation (hoisted out of the per-call hot path).
# ---------------------------------------------------------------------------
def prepare_ws_sparse_linear(weight, ws_mask, bias, compute_dtype=jnp.float32):
    """weight: (out, in); ws_mask: (in, out); bias: (out,).
    Returns (masked-W^T padded slab, padded bias row, dims)."""
    out_features, in_features = weight.shape
    if in_features != out_features:
        raise ValueError(
            "WSSparseLinear's weight*mask elementwise product is only defined "
            f"for square layers (got in={in_features}, out={out_features}).")
    if ws_mask.shape != (in_features, out_features):
        raise ValueError("ws_mask must have shape (in_features, out_features)")

    kp = _round_up(max(in_features, _LANE), _LANE)
    np_ = _round_up(max(out_features, _LANE), _LANE)

    # Masked weight, computed once: (W ⊙ mask)^T, laid out (K, N) so the MXU
    # consumes (M,K) @ (K,N) with no in-kernel transpose and no in-kernel mask.
    wm_t = (weight.astype(jnp.float32) * ws_mask.astype(jnp.float32)).T   # (K, N)
    wm_p = (jnp.zeros((kp, np_), compute_dtype)
            .at[:in_features, :out_features].set(wm_t.astype(compute_dtype)))
    b_p = (jnp.zeros((1, np_), jnp.float32)
           .at[0, :out_features].set(bias.astype(jnp.float32)))
    dims = (in_features, out_features, kp, np_)
    return wm_p, b_p, dims


# ---------------------------------------------------------------------------
# Kernels
# ---------------------------------------------------------------------------
def _resident_kernel(x_ref, wm_ref, b_ref, o_ref):
    # x: (TM, Kp)  wm: (Kp, Np)  b: (1, Np)  o: (TM, Np)
    o_ref[...] = (jnp.dot(x_ref[...], wm_ref[...],
                          preferred_element_type=jnp.float32)
                  + b_ref[...]).astype(o_ref.dtype)


def _streaming_kernel(x_ref, wm_ref, b_ref, o_ref, acc_ref):
    # x: (TM, TK)  wm: (TK, TN)  b: (1, TN)  o: (TM, TN)  acc: (TM, TN) f32
    k = pl.program_id(2)

    @pl.when(k == 0)
    def _():
        acc_ref[...] = jnp.zeros_like(acc_ref)

    acc_ref[...] += jnp.dot(x_ref[...], wm_ref[...],
                            preferred_element_type=jnp.float32)

    @pl.when(k == pl.num_programs(2) - 1)
    def _():
        o_ref[...] = (acc_ref[...] + b_ref[...]).astype(o_ref.dtype)


# ---------------------------------------------------------------------------
# Per-call apply (only x is padded per call).
# ---------------------------------------------------------------------------
def ws_sparse_linear_apply(x, wm_p, b_p, dims, *, max_tile_m=512,
                           tile_n=256, tile_k=256, force_stream=False):
    in_features, out_features, kp, np_ = dims
    lead = x.shape[:-1]
    compute_dtype = wm_p.dtype
    elt = compute_dtype.itemsize

    x2 = x.reshape(-1, in_features).astype(compute_dtype)
    M = x2.shape[0]
    tm, n_m_tiles, mp = _choose_m_tiling(M, max_tile_m)
    x_p = jnp.zeros((mp, kp), compute_dtype).at[:M, :in_features].set(x2)

    out_shape = jax.ShapeDtypeStruct((mp, np_), jnp.float32)
    bias_bytes = 2 * _SUB * np_ * 4   # (1, Np) padded to 8 sublanes, <=2 buffers

    # --- resident-weight path: whole masked-weight slab lives in VMEM -------
    resident_bytes = (kp * np_ * elt           # Buffered(1) weight slab
                      + bias_bytes
                      + 2 * tm * kp * elt      # double-buffered x tile
                      + 2 * tm * np_ * 4)      # double-buffered out tile (f32)
    use_resident = (not force_stream) and resident_bytes <= _VMEM_BUDGET

    if use_resident:
        vmem_limit = max(min(int(resident_bytes * 1.25) + (2 << 20), 56 << 20),
                         32 << 20)
        out = pl.pallas_call(
            _resident_kernel,
            out_shape=out_shape,
            grid_spec=pltpu.PrefetchScalarGridSpec(
                num_scalar_prefetch=0,
                grid=(n_m_tiles,),
                in_specs=[
                    pl.BlockSpec((tm, kp), lambda i: (i, 0)),        # x, walks M
                    pl.BlockSpec((kp, np_), lambda i: (0, 0),        # WM, resident
                                 pipeline_mode=pl.Buffered(1)),
                    pl.BlockSpec((1, np_), lambda i: (0, 0),         # bias, resident
                                 pipeline_mode=pl.Buffered(1)),
                ],
                out_specs=pl.BlockSpec((tm, np_), lambda i: (i, 0)),
            ),
            compiler_params=pltpu.CompilerParams(
                dimension_semantics=("parallel",),
                vmem_limit_bytes=vmem_limit),
        )(x_p, wm_p, b_p)
    else:
        # --- streaming path: (M, N, K) grid with f32 VMEM accumulator -------
        tn = min(tile_n, np_)
        tk = min(tile_k, kp)
        stream_bytes = (2 * tm * tk * elt + 2 * tk * tn * elt + bias_bytes
                        + 2 * tm * tn * 4 + tm * tn * 4)
        vmem_limit = max(min(int(stream_bytes * 1.25) + (2 << 20), 56 << 20),
                         32 << 20)
        out = pl.pallas_call(
            _streaming_kernel,
            out_shape=out_shape,
            grid_spec=pltpu.PrefetchScalarGridSpec(
                num_scalar_prefetch=0,
                grid=(n_m_tiles, np_ // tn, kp // tk),
                in_specs=[
                    pl.BlockSpec((tm, tk), lambda i, j, k: (i, k)),
                    pl.BlockSpec((tk, tn), lambda i, j, k: (k, j)),
                    pl.BlockSpec((1, tn), lambda i, j, k: (0, j)),
                ],
                out_specs=pl.BlockSpec((tm, tn), lambda i, j, k: (i, j)),
                scratch_shapes=[pltpu.VMEM((tm, tn), jnp.float32)],
            ),
            compiler_params=pltpu.CompilerParams(
                dimension_semantics=("parallel", "parallel", "arbitrary"),
                vmem_limit_bytes=vmem_limit),
        )(x_p, wm_p, b_p)

    return out[:M, :out_features].reshape(*lead, out_features)


if __name__ == "__main__":
    in_features = 32
    out_features = 32     # square, as required by the module's weight * ws_mask
    batch, seq = 2, 8

    key = jax.random.PRNGKey(0)
    kx, kw, kb = jax.random.split(key, 3)

    # kaiming_uniform_(a=sqrt(5)) on (out, in) => U(-1/sqrt(fan_in), 1/sqrt(fan_in))
    bound = 1.0 / math.sqrt(in_features)
    weight = jax.random.uniform(kw, (out_features, in_features),
                                minval=-bound, maxval=bound, dtype=jnp.float32)
    bias = jax.random.uniform(kb, (out_features,),
                              minval=-bound, maxval=bound, dtype=jnp.float32)
    ws_mask = generate_watts_strogatz_sparse_mask(in_features, out_features,
                                                  k=4, p=0.5)
    x = jax.random.normal(kx, (batch, seq, in_features), dtype=jnp.float32)

    # One-time weight-side prep (mask multiply, transpose, padding) — hoisted
    # out of the per-call hot path.
    wm_p, b_p, dims = prepare_ws_sparse_linear(weight, ws_mask, bias)

    fwd = jax.jit(lambda xx: ws_sparse_linear_apply(xx, wm_p, b_p, dims))
    y = jax.block_until_ready(fwd(x))

    # Plain-JAX reference (same bug-compatible semantics as the PyTorch module).
    ref = x.reshape(-1, in_features) @ (weight * ws_mask).T + bias
    ref = ref.reshape(batch, seq, out_features)
    assert y.shape == (batch, seq, out_features)
    np.testing.assert_allclose(np.asarray(y), np.asarray(ref), rtol=1e-5, atol=1e-5)

    # Also exercise the streamed (M, N, K)-tiled path used for large layers.
    y_stream = jax.block_until_ready(
        ws_sparse_linear_apply(x, wm_p, b_p, dims, force_stream=True))
    np.testing.assert_allclose(np.asarray(y_stream), np.asarray(ref),
                               rtol=1e-5, atol=1e-5)

    print("KERNEL_OK")
</pallas_src>

<mosaic_0001>
module attributes {stable_mosaic.version = 11 : i64} {
  func.func @_resident_kernel(%arg0: i32, %arg1: memref<8x128xf32, #tpu.memory_space<vmem>>, %arg2: memref<128x128xf32, #tpu.memory_space<vmem>>, %arg3: memref<1x128xf32, #tpu.memory_space<vmem>>, %arg4: memref<8x128xf32, #tpu.memory_space<vmem>>) attributes {dimension_semantics = [#tpu.dimension_semantics<parallel>], iteration_bounds = array<i64: 2>, scalar_prefetch = 0 : i64, scratch_operands = 0 : i64, tpu.core_type = #tpu.core_type<tc>, window_params = [{transform_indices = @transform_0, window_bounds = array<i64: 8, 128>}, {pipeline_mode = #tpu.pipeline_mode<synchronous>, transform_indices = @transform_1, window_bounds = array<i64: 128, 128>}, {pipeline_mode = #tpu.pipeline_mode<synchronous>, transform_indices = @transform_2, window_bounds = array<i64: 1, 128>}, {transform_indices = @transform_3, window_bounds = array<i64: 8, 128>}]} {
    %c0 = arith.constant 0 : index
    %c0_0 = arith.constant 0 : index
    %0 = vector.load %arg1[%c0, %c0_0] : memref<8x128xf32, #tpu.memory_space<vmem>>, vector<8x128xf32>
    %c0_1 = arith.constant 0 : index
    %c0_2 = arith.constant 0 : index
    %1 = vector.load %arg2[%c0_1, %c0_2] : memref<128x128xf32, #tpu.memory_space<vmem>>, vector<128x128xf32>
    %cst = arith.constant dense<0.000000e+00> : vector<8x128xf32>
    %2 = tpu.matmul %0, %1, %cst {dimension_numbers = #tpu.dot_dimension_numbers<[1], [0], [0], [1], [0, 0, 1, 1], [], []>} : vector<8x128xf32>, vector<128x128xf32>, vector<8x128xf32> -> vector<8x128xf32>
    %c0_3 = arith.constant 0 : index
    %c0_4 = arith.constant 0 : index
    %3 = vector.load %arg3[%c0_3, %c0_4] : memref<1x128xf32, #tpu.memory_space<vmem>>, vector<1x128xf32>
    %4 = vector.broadcast %3 : vector<1x128xf32> to vector<8x128xf32>
    %5 = arith.addf %2, %4 : vector<8x128xf32>
    %c0_5 = arith.constant 0 : index
    %c0_6 = arith.constant 0 : index
    %6 = vector.load %arg4[%c0_5, %c0_6] : memref<8x128xf32, #tpu.memory_space<vmem>>, vector<8x128xf32>
    tpu.vector_store %arg4[%c0_5, %c0_6], %5 {strides = array<i32>} : memref<8x128xf32, #tpu.memory_space<vmem>>, vector<8x128xf32>,
    return
  }
  func.func @transform_0(%arg0: i32) -> (i32, i32) {
    %c0_i32 = arith.constant 0 : i32
    %c0_i32_0 = arith.constant 0 : i32
    return %arg0, %c0_i32 : i32, i32
  }
  func.func @transform_1(%arg0: i32) -> (i32, i32) {
    %c0_i32 = arith.constant 0 : i32
    %c0_i32_0 = arith.constant 0 : i32
    %c0_i32_1 = arith.constant 0 : i32
    return %c0_i32, %c0_i32_0 : i32, i32
  }
  func.func @transform_2(%arg0: i32) -> (i32, i32) {
    %c0_i32 = arith.constant 0 : i32
    %c0_i32_0 = arith.constant 0 : i32
    %c0_i32_1 = arith.constant 0 : i32
    return %c0_i32, %c0_i32_0 : i32, i32
  }
  func.func @transform_3(%arg0: i32) -> (i32, i32) {
    %c0_i32 = arith.constant 0 : i32
    %c0_i32_0 = arith.constant 0 : i32
    return %arg0, %c0_i32 : i32, i32
  }
}

</mosaic_0001>

<llo_original>
// kernel: _lambda_.1
$region0: #{_lambda_.1}
  #allocation0 [shape = 'u32[]', space=smem, size = 0x4, offset = 0x4, fixed_abs, tag = 'smem constant byte address 0x4 - core index']
  #allocation1 [shape = 'u32[144,128]{1,0:T(1,128)}', space=vmem, size = 0x12000, scoped, tag = 'internal scratch']
  %s0 = inlined_call_operand.vmem [shape: f32[16,128], index: 0, kind: input, shape index: {}]
  %s1 = inlined_call_operand.hbm [shape: f32[128,128], index: 1, kind: input, shape index: {}]
  %s2 = inlined_call_operand.vmem [shape: f32[1,128], index: 2, kind: input, shape index: {}]
  %s3 = inlined_call_operand.vmem [shape: f32[16,128], index: 3, kind: output, shape index: {}]
  %s4 = sld [smem:[#allocation0]]
  $region49: #{_lambda_.1} parent=0
    _
  %s6 = ssub.s32 1, %s4
  %s7 = scalar_select 0, %s6, %s4
  $region1: #{_lambda_.1} parent=0
    #allocation2 [shape = 'u8[65536]{0}', space=vmem, size = 0x10000, scoped, tag = 'input window, operand 1, single buffered']
    #allocation3 [shape = 's32[2]{0}', space=sflag, size = 0x8, scoped, tag = 'scoped memory for _lambda_.1']
    %8 = vsyncpa [#allocation3], 0
    loop: start=0, step=1, limit=4
    $region2: #{_lambda_.1} parent=1 // loop_pre_header
      _
    $region3: #{_lambda_.1} parent=1 // loop_header
      %s10 = sphi 0, %s14
      %p11 = scmp.ge.s32.totalorder %s10, 4
      %s20 = sphi 0, %s22
      %s23 = sphi 0, %s20
      %s24 = sphi 0, %s23
      %s40 = sphi 0, %s24
      %s44 = sphi 0, %s44
      %s46 = sphi 0, %s44
      %s47 = sphi 0, %s46
      %s61 = sphi 0, %s47
      %s65 = sphi 0, %s65
      %s67 = sphi 0, %s65
      %s68 = sphi 0, %s67
      %s82 = sphi 0, %s68
      %s88 = sphi 0, %s90
      %s91 = sphi 0, %s88
      %s92 = sphi 0, %s91
      %s108 = sphi 0, %s92
    $region4: #{_lambda_.1} parent=1 // loop_header_branch
      %13 = sbr.rel (%p11) target = $region8
    $region5: #{_lambda_.1} parent=1 // loop_body
      %s15 = ssub.s32 %s10, 1
      %s16 = ssub.s32 %s10, 2
      %s17 = sadd.s32 %s10, 1
      %s18 = ssub.s32 %s10, %s17
      %p19 = scmp.eq.s32.totalorder %s18, 0
      %s21 = sadd.s32 %s20, 1
      %s22 = scalar_select %p19, %s20, %s21
      %p25 = pneg %p19
      %p26 = scmp.eq.s32.totalorder %s10, 1
      %p27 = por %p25, %p26
      %p28 = scmp.ne.s32.totalorder %s20, %s23
      %p29 = scmp.eq.s32.totalorder %s10, 0
      %p30 = por %p28, %p29
      %p31 = scmp.ne.s32.totalorder %s20, %s23
      %p32 = scmp.eq.s32.totalorder %s15, 1
      %p33 = por %p31, %p32
      %p34 = scmp.ne.s32.totalorder %s23, %s24
      %p35 = scmp.eq.s32.totalorder %s15, 0
      %p36 = por %p34, %p35
      %p37 = scmp.ne.s32.totalorder %s23, %s24
      %p38 = scmp.eq.s32.totalorder %s16, 1
      %p39 = por %p37, %p38
      %p41 = scmp.ne.s32.totalorder %s24, %s40
      %p42 = scmp.eq.s32.totalorder %s16, 0
      %p43 = por %p41, %p42
      %s45 = sadd.s32 %s44, 1
      %p48 = scmp.eq.s32.totalorder %s10, 1
      %p49 = scmp.ne.s32.totalorder %s44, %s46
      %p50 = scmp.eq.s32.totalorder %s10, 0
      %p51 = por %p49, %p50
      %p52 = scmp.ne.s32.totalorder %s44, %s46
      %p53 = scmp.eq.s32.totalorder %s15, 1
      %p54 = por %p52, %p53
      %p55 = scmp.ne.s32.totalorder %s46, %s47
      %p56 = scmp.eq.s32.totalorder %s15, 0
      %p57 = por %p55, %p56
      %p58 = scmp.ne.s32.totalorder %s46, %s47
      %p59 = scmp.eq.s32.totalorder %s16, 1
      %p60 = por %p58, %p59
      %p62 = scmp.ne.s32.totalorder %s47, %s61
      %p63 = scmp.eq.s32.totalorder %s16, 0
      %p64 = por %p62, %p63
      %s66 = sadd.s32 %s65, 1
      %p69 = scmp.eq.s32.totalorder %s10, 1
      %p70 = scmp.ne.s32.totalorder %s65, %s67
      %p71 = scmp.eq.s32.totalorder %s10, 0
      %p72 = por %p70, %p71
      %p73 = scmp.ne.s32.totalorder %s65, %s67
      %p74 = scmp.eq.s32.totalorder %s15, 1
      %p75 = por %p73, %p74
      %p76 = scmp.ne.s32.totalorder %s67, %s68
      %p77 = scmp.eq.s32.totalorder %s15, 0
      %p78 = por %p76, %p77
      %p79 = scmp.ne.s32.totalorder %s67, %s68
      %p80 = scmp.eq.s32.totalorder %s16, 1
      %p81 = por %p79, %p80
      %p83 = scmp.ne.s32.totalorder %s68, %s82
      %p84 = scmp.eq.s32.totalorder %s16, 0
      %p85 = por %p83, %p84
      %s86 = ssub.s32 %s10, %s17
      %p87 = scmp.eq.s32.totalorder %s86, 0
      %s89 = sadd.s32 %s88, 1
      %s90 = scalar_select %p87, %s88, %s89
      %p93 = pneg %p87
      %p94 = scmp.eq.s32.totalorder %s10, 1
      %p95 = por %p93, %p94
      %p96 = scmp.ne.s32.totalorder %s88, %s91
      %p97 = scmp.eq.s32.totalorder %s10, 0
      %p98 = por %p96, %p97
      %p99 = scmp.ne.s32.totalorder %s88, %s91
      %p100 = scmp.eq.s32.totalorder %s15, 1
      %p101 = por %p99, %p100
      %p102 = scmp.ne.s32.totalorder %s91, %s92
      %p103 = scmp.eq.s32.totalorder %s15, 0
      %p104 = por %p102, %p103
      %p105 = scmp.ne.s32.totalorder %s91, %s92
      %p106 = scmp.eq.s32.totalorder %s16, 1
      %p107 = por %p105, %p106
      %p109 = scmp.ne.s32.totalorder %s92, %s108
      %p110 = scmp.eq.s32.totalorder %s16, 0
      %p111 = por %p109, %p110
      %p112 = scmp.le.s32.totalorder 1, %s10
      %p113 = scmp.lt.s32.totalorder %s10, 3
      %p114 = pnand %p112, %p113
      %p115 = pneg %p114
      // Predicated region
      $region9: #{_lambda_.1} parent=5 // pred_check
        _
      $region10: #{_lambda_.1} parent=5 // pred_check_branch
        %117 = sbr.rel (%p114) target = $region12
      $region11: #{_lambda_.1} parent=5 // pred_region
        %s118 = ssub.s32 %s10, 1
        // Predicated region
        $region13: #{_lambda_.1} parent=11 // pred_check
          %p119 = pneg %p57
        $region14: #{_lambda_.1} parent=11 // pred_check_branch
          %121 = sbr.rel (%p119) target = $region16
        $region15: #{_lambda_.1} parent=11 // pred_region
          %s123 = ssub.s32 2048, 2048
          %124 = vsyncadd [#allocation3], %s123
          %s125 = sshll.u32 [#allocation2], 4
          %s126 = int_to_ptr.vmem [resolvable:$true] %s125
          %131 = dma.hbm_to_vmem [thread:$0]  %s1, 2048, %s126, [#allocation3], 128, 128, 8
        $region16: #{_lambda_.1} parent=11 // pred_fallthru
          _
        // Predicated region
        $region17: #{_lambda_.1} parent=11 // pred_check
          %p132 = pneg %p78
        $region18: #{_lambda_.1} parent=11 // pred_check_branch
          %134 = sbr.rel (%p132) target = $region20
        $region19: #{_lambda_.1} parent=11 // pred_region
          _
        $region20: #{_lambda_.1} parent=11 // pred_fallthru
          _
      $region12: #{_lambda_.1} parent=5 // pred_fallthru
        _
      %p135 = scmp.lt.s32.totalorder %s10, 2
      // Predicated region
      $region21: #{_lambda_.1} parent=5 // pred_check
        %p136 = pneg %p135
      $region22: #{_lambda_.1} parent=5 // pred_check_branch
        %138 = sbr.rel (%p136) target = $region24
      $region23: #{_lambda_.1} parent=5 // pred_region
        // Predicated region
        $region25: #{_lambda_.1} parent=23 // pred_check
          %p139 = pneg %p30
        $region26: #{_lambda_.1} parent=23 // pred_check_branch
          %141 = sbr.rel (%p139) target = $region28
        $region27: #{_lambda_.1} parent=23 // pred_region
          %p142 = scmp.lt.s32.totalorder %s10, 1
          %s143 = scalar_select %p142, %s10, 1
          %s144 = smul.addr %s143, 8
          %s145 = scalar_lea.vmem %s0, %s144
        $region28: #{_lambda_.1} parent=23 // pred_fallthru
          _
      $region24: #{_lambda_.1} parent=5 // pred_fallthru
        _
      %p146 = scmp.le.s32.totalorder 1, %s10
      %p147 = scmp.lt.s32.totalorder %s10, 3
      %p148 = pnand %p146, %p147
      %p149 = pneg %p148
      // Predicated region
      $region29: #{_lambda_.1} parent=5 // pred_check
        _
      $region30: #{_lambda_.1} parent=5 // pred_check_branch
        %151 = sbr.rel (%p148) target = $region32
      $region31: #{_lambda_.1} parent=5 // pred_region
        %s152 = ssub.s32 %s10, 1
        // Predicated region
        $region33: #{_lambda_.1} parent=31 // pred_check
          %p153 = pneg %p57
        $region34: #{_lambda_.1} parent=31 // pred_check_branch
          %155 = sbr.rel (%p153) target = $region36
        $region35: #{_lambda_.1} parent=31 // pred_region
          %156 = dma.done [#allocation3], 2048
        $region36: #{_lambda_.1} parent=31 // pred_fallthru
          _
        %p157 = scmp.lt.s32.totalorder %s15, 1
        %s158 = scalar_select %p157, %s15, 1
        %s159 = smul.addr %s158, 8
        %s160 = scalar_lea.vmem %s0, %s159
        %p161 = pneg %p36
        %p162 = pneg %p33
        %p163 = pneg %p57
        %p164 = pneg %p54
        %p165 = pneg %p78
        %p166 = pneg %p75
        %p167 = pneg %p104
        %p168 = pneg %p101
        %p169 = scmp.lt.s32.totalorder %s15, 1
        %s170 = scalar_select %p169, %s15, 1
        %s171 = smul.addr %s170, 8
        %s172 = scalar_lea.vmem %s3, %s171
        %p173 = scmp.lt.s32.totalorder %s15, 1
        %s174 = scalar_select %p173, %s15, 1
        %s175 = smul.addr %s174, 8
        %s176 = scalar_lea.vmem %s0, %s175
        %p177 = scmp.lt.s32.totalorder %s15, 1
        %s178 = scalar_select %p177, %s15, 1
        %s179 = smul.addr %s178, 8
        %s180 = scalar_lea.vmem %s3, %s179
        %v181 = vld [vmem:[%s176] sm:$0xff]
        %v182 = vld [vmem:[#allocation2] sm:$0xff]
        %v183 = vld [vmem:[#allocation2 + $0x8] sm:$0xff]
        %v184 = vld [vmem:[#allocation2 + $0x10] sm:$0xff]
        %v185 = vld [vmem:[#allocation2 + $0x18] sm:$0xff]
        %v186 = vld [vmem:[#allocation2 + $0x20] sm:$0xff]
        %v187 = vld [vmem:[#allocation2 + $0x28] sm:$0xff]
        %v188 = vld [vmem:[#allocation2 + $0x30] sm:$0xff]
        %v189 = vld [vmem:[#allocation2 + $0x38] sm:$0xff]
        %v190 = vld [vmem:[#allocation2 + $0x40] sm:$0xff]
        %v191 = vld [vmem:[#allocation2 + $0x48] sm:$0xff]
        %v192 = vld [vmem:[#allocation2 + $0x50] sm:$0xff]
        %v193 = vld [vmem:[#allocation2 + $0x58] sm:$0xff]
        %v194 = vld [vmem:[#allocation2 + $0x60] sm:$0xff]
        %v195 = vld [vmem:[#allocation2 + $0x68] sm:$0xff]
        %v196 = vld [vmem:[#allocation2 + $0x70] sm:$0xff]
        %v197 = vld [vmem:[#allocation2 + $0x78] sm:$0xff]
        %v198 = vld [vmem:[%s2] sm:$0x1]
        %v200 = vlaneseq
        %v201 = vshrl.u32 %v200, 7
        %v202 = vsub.s32 0, %v201
        %v203 = vrot.slane %v198, %v202
        %205 = vmatprep.subr.mxu0 0.0
        %206 = vmatpush1.msra.mxu0 %v182
        %207 = vmatprep.subr.mxu0 0.0
        %208 = vmatpush1.msra.mxu0 %v183
        %209 = vmatprep.subr.mxu0 0.0
        %210 = vmatpush1.msra.mxu0 %v184
        %211 = vmatprep.subr.mxu0 0.0
        %212 = vmatpush1.msra.mxu0 %v185
        %213 = vmatprep.subr.mxu0 0.0
        %214 = vmatpush1.msra.mxu0 %v186
        %215 = vmatprep.subr.mxu0 0.0
        %216 = vmatpush1.msra.mxu0 %v187
        %217 = vmatprep.subr.mxu0 0.0
        %218 = vmatpush1.msra.mxu0 %v188
        %219 = vmatprep.subr.mxu0 0.0
        %220 = vmatpush1.msra.mxu0 %v189
        %221 = vmatprep.subr.mxu0 0.0
        %222 = vmatpush1.msra.mxu0 %v190
        %223 = vmatprep.subr.mxu0 0.0
        %224 = vmatpush1.msra.mxu0 %v191
        %225 = vmatprep.subr.mxu0 0.0
        %226 = vmatpush1.msra.mxu0 %v192
        %227 = vmatprep.subr.mxu0 0.0
        %228 = vmatpush1.msra.mxu0 %v193
        %229 = vmatprep.subr.mxu0 0.0
        %230 = vmatpush1.msra.mxu0 %v194
        %231 = vmatprep.subr.mxu0 0.0
        %232 = vmatpush1.msra.mxu0 %v195
        %233 = vmatprep.subr.mxu0 0.0
        %234 = vmatpush1.msra.mxu0 %v196
        %235 = vmatprep.subr.mxu0 0.0
        %236 = vmatpush1.msra.mxu0 %v197
        %237 = vmatprep.subr.mxu0 0.0
        %238 = vmatpush1.msra.mxu0 0.0
        %239 = vmatprep.subr.mxu0 0.0
        %240 = vmatpush1.msra.mxu0 0.0
        %241 = vmatprep.subr.mxu0 0.0
        %242 = vmatpush1.msra.mxu0 0.0
        %243 = vmatprep.subr.mxu0 0.0
        %244 = vmatpush1.msra.mxu0 0.0
        %245 = vmatprep.subr.mxu0 0.0
        %246 = vmatpush1.msra.mxu0 0.0
        %247 = vmatprep.subr.mxu0 0.0
        %248 = vmatpush1.msra.mxu0 0.0
        %249 = vmatprep.subr.mxu0 0.0
        %250 = vmatpush1.msra.mxu0 0.0
        %251 = vmatprep.subr.mxu0 0.0
        %252 = vmatpush1.msra.mxu0 0.0
        %253 = vmatprep.subr.mxu0 0.0
        %254 = vmatpush1.msra.mxu0 0.0
        %255 = vmatprep.subr.mxu0 0.0
        %256 = vmatpush1.msra.mxu0 0.0
        %257 = vmatprep.subr.mxu0 0.0
        %258 = vmatpush1.msra.mxu0 0.0
        %259 = vmatprep.subr.mxu0 0.0
        %260 = vmatpush1.msra.mxu0 0.0
        %261 = vmatprep.subr.mxu0 0.0
        %262 = vmatpush1.msra.mxu0 0.0
        %263 = vmatprep.subr.mxu0 0.0
        %264 = vmatpush1.msra.mxu0 0.0
        %265 = vmatprep.subr.mxu0 0.0
        %266 = vmatpush1.msra.mxu0 0.0
        %267 = vmatprep.subr.mxu0 0.0
        %268 = vmatpush1.msra.mxu0 0.0
        %269 = vmatprep.mubr.f32.mxu0 0.0
        %270 = vmatmul.mubr.f32.gmra.mrb[0].mxu0 %v181
        %v271 = vpop.f32.mrb[0].mxu0
        %v272 = vadd.f32 %v203, %v271
        %v273 = vpop.f32.mrb[0].mxu0
        %274 = vdwg.mxu0
        %275 = vst [vmem:[%s180] sm:$0xff] %v272
        %p276 = scmp.lt.s32.totalorder %s15, 1
        %s277 = scalar_select %p276, %s15, 1
        %s278 = smul.addr %s277, 8
        %s279 = scalar_lea.vmem %s3, %s278
        // Predicated region
        $region37: #{_lambda_.1} parent=31 // pred_check
          %p280 = pneg %p101
        $region38: #{_lambda_.1} parent=31 // pred_check_branch
          %282 = sbr.rel (%p280) target = $region40
        $region39: #{_lambda_.1} parent=31 // pred_region
          _
        $region40: #{_lambda_.1} parent=31 // pred_fallthru
          _
      $region32: #{_lambda_.1} parent=5 // pred_fallthru
        _
      %p283 = scmp.le.s32.totalorder 2, %s10
      // Predicated region
      $region41: #{_lambda_.1} parent=5 // pred_check
        %p284 = pneg %p283
      $region42: #{_lambda_.1} parent=5 // pred_check_branch
        %286 = sbr.rel (%p284) target = $region44
      $region43: #{_lambda_.1} parent=5 // pred_region
        %s287 = ssub.s32 %s10, 2
        // Predicated region
        $region45: #{_lambda_.1} parent=43 // pred_check
          %p288 = pneg %p107
        $region46: #{_lambda_.1} parent=43 // pred_check_branch
          %290 = sbr.rel (%p288) target = $region48
        $region47: #{_lambda_.1} parent=43 // pred_region
          %p291 = scmp.lt.s32.totalorder %s16, 1
          %s292 = scalar_select %p291, %s16, 1
          %s293 = smul.addr %s292, 8
          %s294 = scalar_lea.vmem %s3, %s293
        $region48: #{_lambda_.1} parent=43 // pred_fallthru
          _
      $region44: #{_lambda_.1} parent=5 // pred_fallthru
        _
    $region6: #{_lambda_.1} parent=1 // loop_footer
      %s14 = sadd.s32 1, %s10
    $region7: #{_lambda_.1} parent=1 // loop_footer_branch
      %9 = sbr.rel target = $region3
    $region8: #{_lambda_.1} parent=1 // loop_exit
      _
    %295 = vsyncpa [#allocation3], 1
    %s296 = scalar_lea.sflag [#allocation3], 1
    %297 = vsyncpa %s296, 1

</llo_original>
